<compile_context>
chip_gen: v6e
topology: v6e:2x2x1
jax: 0.10.0
libtpu: 0.0.40
codegen_flags: <defaults>
</compile_context>

<pallas_src>
import functools

import jax
import jax.numpy as jnp
from jax.experimental import pallas as pl
from jax.experimental.pallas import tpu as pltpu

LANE = 128
MIB = 1024 * 1024
RESIDENT_BYTES_CAP = 8 * MIB   # hold X / HW resident only if (2x-buffered) it stays v7x-safe
VMEM_LIMIT_CAP = 48 * MIB      # stay under v7x's 64 MiB physical VMEM

# Measured tiled-kernel efficiency vs HBM roofline (per-grid-step overhead).
_TILE_EFF = {1024: 0.87, 512: 0.85, 256: 0.63, 128: 0.29}


def _round_up(x, m):
    return (x + m - 1) // m * m


def _choose_tiling(n):
    """Pick (n_pad, tm, tk): pad N up to a multiple of the chosen tile instead
    of shrinking the tile to match N; trade padded-A traffic vs per-step
    efficiency."""
    n128 = _round_up(max(n, LANE), LANE)
    if n128 <= 1024:
        return n128, n128, n128            # single tile covers everything
    best = None
    for t in (1024, 512, 256, 128):
        n_pad = _round_up(n128, t)
        # relative cost ~ (padded A bytes) / efficiency(tile)
        cost = (n_pad * n_pad) / (n128 * n128) / _TILE_EFF[t]
        if best is None or cost < best[0]:
            best = (cost, t, n_pad)
    _, t, n_pad = best
    return n_pad, t, t


def _pad2d(x, rows, cols):
    return jnp.pad(x, ((0, rows - x.shape[0]), (0, cols - x.shape[1])))


# ----------------------------------------------------------------------------
# Kernel 1: HW = relu((A @ X) @ W1 + b1) @ W2        (row-tiled, k-reduction)
# ----------------------------------------------------------------------------
def _layer1_kernel(a_ref, x_ref, w1_ref, b1_ref, w2_ref, hw_ref, acc_ref,
                   *, tk, x_resident):
    k = pl.program_id(1)

    @pl.when(k == 0)
    def _():
        acc_ref[...] = jnp.zeros_like(acc_ref)

    if x_resident:
        # X is fully VMEM-resident (constant-index BlockSpec); slice the k tile.
        off = pl.multiple_of(k * tk, tk)
        x_blk = x_ref[pl.ds(off, tk), :]
    else:
        x_blk = x_ref[...]

    # N^2-sized aggregation at in_channels width (bf16 MXU, f32 accumulation).
    acc_ref[...] += jnp.dot(a_ref[...], x_blk,
                            preferred_element_type=jnp.float32)

    @pl.when(k == pl.num_programs(1) - 1)
    def _():
        # Epilogue in f32 (weights kept f32 for parity; hidden under A DMA).
        h = jnp.dot(acc_ref[...], w1_ref[...],
                    preferred_element_type=jnp.float32)
        h = jnp.maximum(h + b1_ref[...], 0.0)          # bias + ReLU in f32
        # Dropout(p=0.1) with training=False is the identity at inference.
        # TODO(synk): wire pltpu.prng_seed/prng_random_bits for training mode.
        hw = jnp.dot(h, w2_ref[...], preferred_element_type=jnp.float32)
        hw_ref[...] = hw.astype(hw_ref.dtype)


# ----------------------------------------------------------------------------
# Kernel 2: OUT = A @ HW + b2       (row-tiled, accumulate directly in o_ref)
# ----------------------------------------------------------------------------
def _layer2_kernel(a_ref, hw_ref, b2_ref, o_ref, *, tk, hw_resident):
    k = pl.program_id(1)

    @pl.when(k == 0)
    def _():
        o_ref[...] = jnp.zeros_like(o_ref)

    if hw_resident:
        off = pl.multiple_of(k * tk, tk)
        hw_blk = hw_ref[pl.ds(off, tk), :]
    else:
        hw_blk = hw_ref[...]

    # Output block index is constant along k => stays VMEM-resident; no scratch.
    o_ref[...] += jnp.dot(a_ref[...], hw_blk,
                          preferred_element_type=jnp.float32)

    @pl.when(k == pl.num_programs(1) - 1)
    def _():
        o_ref[...] += b2_ref[...]


# ----------------------------------------------------------------------------
# Wrapper: padding, casts, BlockSpecs, grid, VMEM budgeting
# ----------------------------------------------------------------------------
def gcn2_forward(a_hat, x, w1, b1, w2, b2):
    n = x.shape[0]
    f_in, f_hid = w1.shape
    f_out = w2.shape[1]

    n_pad, tm, tk = _choose_tiling(n)
    f_in_p = _round_up(f_in, LANE)
    f_hid_p = _round_up(f_hid, LANE)
    f_out_p = _round_up(f_out, LANE)

    # Residency guards (sized so 2x-buffered copies still fit v7x VMEM).
    x_resident = n_pad * f_in_p * 2 <= RESIDENT_BYTES_CAP
    hw_resident = n_pad * f_out_p * 2 <= RESIDENT_BYTES_CAP

    a_p = _pad2d(a_hat, n_pad, n_pad).astype(jnp.bfloat16)
    # TODO(synk): optional accuracy-traded A compression (int8 on v5e/v6e,
    # fp8 e4m3 on v7x) to halve the dominant N^2 HBM stream.
    x_p = _pad2d(x, n_pad, f_in_p).astype(jnp.bfloat16)
    w1_p = _pad2d(w1, f_in_p, f_hid_p).astype(jnp.float32)
    w2_p = _pad2d(w2, f_hid_p, f_out_p).astype(jnp.float32)
    b1_p = _pad2d(b1.reshape(1, -1), 1, f_hid_p).astype(jnp.float32)
    b2_p = _pad2d(b2.reshape(1, -1), 1, f_out_p).astype(jnp.float32)

    grid = (n_pad // tm, n_pad // tk)
    dimsem = ("parallel", "arbitrary")   # row tiles parallel, k-reduction last

    # ---- Layer 1 -------------------------------------------------------
    if x_resident:
        x_spec = pl.BlockSpec((n_pad, f_in_p), lambda i, k: (0, 0))
        x_vmem = 2 * n_pad * f_in_p * 2
        x_hbm = n_pad * f_in_p * 2
    else:
        x_spec = pl.BlockSpec((tk, f_in_p), lambda i, k: (k, 0))
        x_vmem = 2 * tk * f_in_p * 2
        x_hbm = (n_pad // tm) * n_pad * f_in_p * 2

    wts_vmem = 2 * (f_in_p * f_hid_p + f_hid_p + f_hid_p * f_out_p) * 4
    l1_vmem = (2 * tm * tk * 2 + x_vmem + wts_vmem
               + tm * f_in_p * 4 + 2 * tm * f_out_p * 2)
    l1_limit = int(min(VMEM_LIMIT_CAP, max(32 * MIB, 1.5 * l1_vmem)))

    hw = pl.pallas_call(
        functools.partial(_layer1_kernel, tk=tk, x_resident=x_resident),
        out_shape=jax.ShapeDtypeStruct((n_pad, f_out_p), jnp.bfloat16),
        grid_spec=pltpu.PrefetchScalarGridSpec(
            num_scalar_prefetch=0,
            grid=grid,
            in_specs=[
                pl.BlockSpec((tm, tk), lambda i, k: (i, k)),            # A tile
                x_spec,                                                 # X
                pl.BlockSpec((f_in_p, f_hid_p), lambda i, k: (0, 0)),   # W1
                pl.BlockSpec((1, f_hid_p), lambda i, k: (0, 0)),        # b1
                pl.BlockSpec((f_hid_p, f_out_p), lambda i, k: (0, 0)),  # W2
            ],
            out_specs=pl.BlockSpec((tm, f_out_p), lambda i, k: (i, 0)),
            scratch_shapes=[pltpu.VMEM((tm, f_in_p), jnp.float32)],
        ),
        compiler_params=pltpu.CompilerParams(
            dimension_semantics=dimsem, vmem_limit_bytes=l1_limit),
        cost_estimate=pl.CostEstimate(
            flops=2 * n_pad * n_pad * f_in_p
                  + 2 * n_pad * (f_in_p * f_hid_p + f_hid_p * f_out_p),
            transcendentals=0,
            bytes_accessed=n_pad * n_pad * 2 + x_hbm
                           + (f_in_p * f_hid_p + f_hid_p
                              + f_hid_p * f_out_p) * 4
                           + n_pad * f_out_p * 2,
        ),
    )(a_p, x_p, w1_p, b1_p, w2_p)

    # ---- Layer 2 -------------------------------------------------------
    if hw_resident:
        hw_spec = pl.BlockSpec((n_pad, f_out_p), lambda i, k: (0, 0))
        hw_vmem = 2 * n_pad * f_out_p * 2
        hw_hbm = n_pad * f_out_p * 2
    else:
        hw_spec = pl.BlockSpec((tk, f_out_p), lambda i, k: (k, 0))
        hw_vmem = 2 * tk * f_out_p * 2
        hw_hbm = (n_pad // tm) * n_pad * f_out_p * 2

    l2_vmem = 2 * tm * tk * 2 + hw_vmem + 2 * f_out_p * 4 + 2 * tm * f_out_p * 4
    l2_limit = int(min(VMEM_LIMIT_CAP, max(32 * MIB, 1.5 * l2_vmem)))

    out_p = pl.pallas_call(
        functools.partial(_layer2_kernel, tk=tk, hw_resident=hw_resident),
        out_shape=jax.ShapeDtypeStruct((n_pad, f_out_p), jnp.float32),
        grid_spec=pltpu.PrefetchScalarGridSpec(
            num_scalar_prefetch=0,
            grid=grid,
            in_specs=[
                pl.BlockSpec((tm, tk), lambda i, k: (i, k)),            # A tile
                hw_spec,                                                # HW
                pl.BlockSpec((1, f_out_p), lambda i, k: (0, 0)),        # b2
            ],
            out_specs=pl.BlockSpec((tm, f_out_p), lambda i, k: (i, 0)),
        ),
        compiler_params=pltpu.CompilerParams(
            dimension_semantics=dimsem, vmem_limit_bytes=l2_limit),
        cost_estimate=pl.CostEstimate(
            flops=2 * n_pad * n_pad * f_out_p,
            transcendentals=0,
            bytes_accessed=n_pad * n_pad * 2 + hw_hbm
                           + f_out_p * 4 + n_pad * f_out_p * 4,
        ),
    )(a_p, hw, b2_p)

    # TODO(synk): for large / sparse graphs, replace the dense N^2 aggregation
    # with a scalar-prefetched CSR / block-sparse SpMM (PrefetchScalarGridSpec
    # row-block offsets in SMEM driving the A index_map, pl.when to skip
    # empty tiles).
    return out_p[:n, :f_out]


# ----------------------------------------------------------------------------
# Glue: symmetric-normalized dense adjacency (gcn_norm semantics)
# ----------------------------------------------------------------------------
def build_normalized_adjacency(edge_index, edge_weight, num_nodes):
    src, dst = edge_index[0], edge_index[1]
    if edge_weight is None:
        edge_weight = jnp.ones(src.shape[0], dtype=jnp.float32)

    loop = jnp.arange(num_nodes, dtype=src.dtype)
    src = jnp.concatenate([src, loop])
    dst = jnp.concatenate([dst, loop])
    w = jnp.concatenate([edge_weight, jnp.ones(num_nodes, dtype=jnp.float32)])

    a = jnp.zeros((num_nodes, num_nodes), dtype=jnp.float32)
    a = a.at[dst, src].add(w)                      # A[dst, src] = w

    deg = a.sum(axis=1)
    dinv = jnp.where(deg > 0, jax.lax.rsqrt(deg), 0.0)
    return dinv[:, None] * a * dinv[None, :]


def glorot(key, fan_in, fan_out):
    limit = jnp.sqrt(6.0 / (fan_in + fan_out))
    return jax.random.uniform(key, (fan_in, fan_out), jnp.float32, -limit, limit)


if __name__ == "__main__":
    num_nodes = 16
    in_channels = 8
    num_hid = 16
    out_channels = 4
    num_edges = 32

    key = jax.random.PRNGKey(0)
    k_x, k_src, k_dst, k_w1, k_w2, k_b1, k_b2 = jax.random.split(key, 7)

    x = jax.random.normal(k_x, (num_nodes, in_channels), jnp.float32)
    edge_index = jnp.stack([
        jax.random.randint(k_src, (num_edges,), 0, num_nodes),
        jax.random.randint(k_dst, (num_edges,), 0, num_nodes),
    ]).astype(jnp.int32)
    edge_weight = None   # matches GCN2.forward default

    w1 = glorot(k_w1, in_channels, num_hid)
    b1 = 0.1 * jax.random.normal(k_b1, (num_hid,), jnp.float32)
    w2 = glorot(k_w2, num_hid, out_channels)
    b2 = 0.1 * jax.random.normal(k_b2, (out_channels,), jnp.float32)

    a_hat = build_normalized_adjacency(edge_index, edge_weight, num_nodes)

    out = gcn2_forward(a_hat, x, w1, b1, w2, b2)
    out = jax.block_until_ready(out)
    assert out.shape == (num_nodes, out_channels)

    # Reference (a): pure-f32 module semantics (loose tolerance due to bf16 A/X).
    h32 = jnp.maximum(a_hat @ (x @ w1) + b1[None, :], 0.0)
    ref32 = a_hat @ (h32 @ w2) + b2[None, :]

    # Reference (b): precision-mirrored (same bf16 rounding points as kernels).
    bf = lambda t: t.astype(jnp.bfloat16)
    hp = jax.lax.Precision.HIGHEST
    ax = jnp.dot(bf(a_hat), bf(x), preferred_element_type=jnp.float32)
    h = jnp.maximum(jnp.dot(ax, w1, precision=hp) + b1[None, :], 0.0)
    hw_ref = jnp.dot(h, w2, precision=hp).astype(jnp.bfloat16)
    ref_bf = jnp.dot(bf(a_hat), hw_ref,
                     preferred_element_type=jnp.float32) + b2[None, :]

    assert jnp.allclose(out, ref_bf, atol=3e-2, rtol=3e-2), \
        float(jnp.max(jnp.abs(out - ref_bf)))
    assert jnp.allclose(out, ref32, atol=1e-1, rtol=1e-1), \
        float(jnp.max(jnp.abs(out - ref32)))

    print("KERNEL_OK")
</pallas_src>

<mosaic_0001>
module attributes {stable_mosaic.version = 11 : i64} {
  func.func @_layer1_kernel(%arg0: i32, %arg1: i32, %arg2: memref<128x128xbf16, #tpu.memory_space<vmem>>, %arg3: memref<128x128xbf16, #tpu.memory_space<vmem>>, %arg4: memref<128x128xf32, #tpu.memory_space<vmem>>, %arg5: memref<1x128xf32, #tpu.memory_space<vmem>>, %arg6: memref<128x128xf32, #tpu.memory_space<vmem>>, %arg7: memref<128x128xbf16, #tpu.memory_space<vmem>>, %arg8: memref<128x128xf32, #tpu.memory_space<vmem>>) attributes {dimension_semantics = [#tpu.dimension_semantics<parallel>, #tpu.dimension_semantics<arbitrary>], iteration_bounds = array<i64: 1, 1>, scalar_prefetch = 0 : i64, scratch_operands = 1 : i64, tpu.core_type = #tpu.core_type<tc>, window_params = [{transform_indices = @transform_0, window_bounds = array<i64: 128, 128>}, {pipeline_mode = #tpu.pipeline_mode<synchronous>, transform_indices = @transform_1, window_bounds = array<i64: 128, 128>}, {pipeline_mode = #tpu.pipeline_mode<synchronous>, transform_indices = @transform_2, window_bounds = array<i64: 128, 128>}, {pipeline_mode = #tpu.pipeline_mode<synchronous>, transform_indices = @transform_3, window_bounds = array<i64: 1, 128>}, {pipeline_mode = #tpu.pipeline_mode<synchronous>, transform_indices = @transform_4, window_bounds = array<i64: 128, 128>}, {transform_indices = @transform_5, window_bounds = array<i64: 128, 128>}]} {
    %c0_i32 = arith.constant 0 : i32
    %0 = arith.cmpi eq, %arg1, %c0_i32 : i32
    %1 = arith.extui %0 : i1 to i32
    %c0_i32_0 = arith.constant 0 : i32
    %2 = arith.cmpi ne, %1, %c0_i32_0 : i32
    scf.if %2 {
      %cst_9 = arith.constant 0.000000e+00 : f32
      %15 = vector.broadcast %cst_9 : f32 to vector<128x128xf32>
      %c0_10 = arith.constant 0 : index
      %c0_11 = arith.constant 0 : index
      %16 = vector.load %arg8[%c0_10, %c0_11] : memref<128x128xf32, #tpu.memory_space<vmem>>, vector<128x128xf32>
      tpu.vector_store %arg8[%c0_10, %c0_11], %15 {strides = array<i32>} : memref<128x128xf32, #tpu.memory_space<vmem>>, vector<128x128xf32>,
    } else {
    }
    %c128_i32 = arith.constant 128 : i32
    %3 = arith.muli %arg1, %c128_i32 : i32
    %4 = tpu.assume_multiple %3, 128 : i32
    %5 = arith.index_cast %4 : i32 to index
    %c0 = arith.constant 0 : index
    %6 = vector.load %arg3[%5, %c0] : memref<128x128xbf16, #tpu.memory_space<vmem>>, vector<128x128xbf16>
    %c0_1 = arith.constant 0 : index
    %c0_2 = arith.constant 0 : index
    %7 = vector.load %arg8[%c0_1, %c0_2] : memref<128x128xf32, #tpu.memory_space<vmem>>, vector<128x128xf32>
    %c0_3 = arith.constant 0 : index
    %c0_4 = arith.constant 0 : index
    %8 = vector.load %arg2[%c0_3, %c0_4] : memref<128x128xbf16, #tpu.memory_space<vmem>>, vector<128x128xbf16>
    %cst = arith.constant dense<0.000000e+00> : vector<128x128xf32>
    %9 = tpu.matmul %8, %6, %cst {dimension_numbers = #tpu.dot_dimension_numbers<[1], [0], [0], [1], [0, 0, 1, 1], [], []>} : vector<128x128xbf16>, vector<128x128xbf16>, vector<128x128xf32> -> vector<128x128xf32>
    %10 = arith.addf %7, %9 : vector<128x128xf32>
    %c0_5 = arith.constant 0 : index
    %c0_6 = arith.constant 0 : index
    %11 = vector.load %arg8[%c0_5, %c0_6] : memref<128x128xf32, #tpu.memory_space<vmem>>, vector<128x128xf32>
    tpu.vector_store %arg8[%c0_5, %c0_6], %10 {strides = array<i32>} : memref<128x128xf32, #tpu.memory_space<vmem>>, vector<128x128xf32>,
    %c0_i32_7 = arith.constant 0 : i32
    %12 = arith.cmpi eq, %arg1, %c0_i32_7 : i32
    %13 = arith.extui %12 : i1 to i32
    %c0_i32_8 = arith.constant 0 : i32
    %14 = arith.cmpi ne, %13, %c0_i32_8 : i32
    scf.if %14 {
      %c0_9 = arith.constant 0 : index
      %c0_10 = arith.constant 0 : index
      %15 = vector.load %arg8[%c0_9, %c0_10] : memref<128x128xf32, #tpu.memory_space<vmem>>, vector<128x128xf32>
      %c0_11 = arith.constant 0 : index
      %c0_12 = arith.constant 0 : index
      %16 = vector.load %arg4[%c0_11, %c0_12] : memref<128x128xf32, #tpu.memory_space<vmem>>, vector<128x128xf32>
      %cst_13 = arith.constant dense<0.000000e+00> : vector<128x128xf32>
      %17 = tpu.matmul %15, %16, %cst_13 {dimension_numbers = #tpu.dot_dimension_numbers<[1], [0], [0], [1], [0, 0, 1, 1], [], []>} : vector<128x128xf32>, vector<128x128xf32>, vector<128x128xf32> -> vector<128x128xf32>
      %c0_14 = arith.constant 0 : index
      %c0_15 = arith.constant 0 : index
      %18 = vector.load %arg5[%c0_14, %c0_15] : memref<1x128xf32, #tpu.memory_space<vmem>>, vector<1x128xf32>
      %19 = vector.broadcast %18 : vector<1x128xf32> to vector<128x128xf32>
      %20 = arith.addf %17, %19 : vector<128x128xf32>
      %cst_16 = arith.constant 0.000000e+00 : f32
      %21 = vector.broadcast %cst_16 : f32 to vector<128x128xf32>
      %22 = arith.maximumf %20, %21 : vector<128x128xf32>
      %c0_17 = arith.constant 0 : index
      %c0_18 = arith.constant 0 : index
      %23 = vector.load %arg6[%c0_17, %c0_18] : memref<128x128xf32, #tpu.memory_space<vmem>>, vector<128x128xf32>
      %cst_19 = arith.constant dense<0.000000e+00> : vector<128x128xf32>
      %24 = tpu.matmul %22, %23, %cst_19 {dimension_numbers = #tpu.dot_dimension_numbers<[1], [0], [0], [1], [0, 0, 1, 1], [], []>} : vector<128x128xf32>, vector<128x128xf32>, vector<128x128xf32> -> vector<128x128xf32>
      %25 = arith.truncf %24 : vector<128x128xf32> to vector<128x128xbf16>
      %c0_20 = arith.constant 0 : index
      %c0_21 = arith.constant 0 : index
      %26 = vector.load %arg7[%c0_20, %c0_21] : memref<128x128xbf16, #tpu.memory_space<vmem>>, vector<128x128xbf16>
      tpu.vector_store %arg7[%c0_20, %c0_21], %25 {strides = array<i32>} : memref<128x128xbf16, #tpu.memory_space<vmem>>, vector<128x128xbf16>,
    } else {
    }
    return
  }
  func.func @transform_0(%arg0: i32, %arg1: i32) -> (i32, i32) {
    %c0_i32 = arith.constant 0 : i32
    return %arg0, %arg1 : i32, i32
  }
  func.func @transform_1(%arg0: i32, %arg1: i32) -> (i32, i32) {
    %c0_i32 = arith.constant 0 : i32
    %c0_i32_0 = arith.constant 0 : i32
    %c0_i32_1 = arith.constant 0 : i32
    return %c0_i32, %c0_i32_0 : i32, i32
  }
  func.func @transform_2(%arg0: i32, %arg1: i32) -> (i32, i32) {
    %c0_i32 = arith.constant 0 : i32
    %c0_i32_0 = arith.constant 0 : i32
    %c0_i32_1 = arith.constant 0 : i32
    return %c0_i32, %c0_i32_0 : i32, i32
  }
  func.func @transform_3(%arg0: i32, %arg1: i32) -> (i32, i32) {
    %c0_i32 = arith.constant 0 : i32
    %c0_i32_0 = arith.constant 0 : i32
    %c0_i32_1 = arith.constant 0 : i32
    return %c0_i32, %c0_i32_0 : i32, i32
  }
  func.func @transform_4(%arg0: i32, %arg1: i32) -> (i32, i32) {
    %c0_i32 = arith.constant 0 : i32
    %c0_i32_0 = arith.constant 0 : i32
    %c0_i32_1 = arith.constant 0 : i32
    return %c0_i32, %c0_i32_0 : i32, i32
  }
  func.func @transform_5(%arg0: i32, %arg1: i32) -> (i32, i32) {
    %c0_i32 = arith.constant 0 : i32
    %c0_i32_0 = arith.constant 0 : i32
    return %arg0, %c0_i32 : i32, i32
  }
}

</mosaic_0001>

<llo_original>
// kernel: tpu_custom_call.1
$region0: #{tpu_custom_call.1}
  #allocation0 [shape = 'u32[]', space=smem, size = 0x4, offset = 0x4, fixed_abs, tag = 'smem constant byte address 0x4 - core index']
  #allocation1 [shape = 'u32[144,128]{1,0:T(1,128)}', space=vmem, size = 0x12000, scoped, tag = 'internal scratch']
  #allocation2 [shape = 'f32[128,128]{1,0:T(8,128)}', space=vmem, size = 0x10000, scoped, tag = 'scratch operand']
  %s0 = inlined_call_operand.hbm [shape: bf16[128,128], index: 0, kind: input, shape index: {}]
  %s1 = inlined_call_operand.hbm [shape: bf16[128,128], index: 1, kind: input, shape index: {}]
  %s2 = inlined_call_operand.hbm [shape: f32[128,128], index: 2, kind: input, shape index: {}]
  %s3 = inlined_call_operand.vmem [shape: f32[1,128], index: 3, kind: input, shape index: {}]
  %s4 = inlined_call_operand.hbm [shape: f32[128,128], index: 4, kind: input, shape index: {}]
  %s5 = inlined_call_operand.hbm [shape: bf16[128,128], index: 5, kind: output, shape index: {}]
  %s6 = sld [smem:[#allocation0]]
  $region54: #{tpu_custom_call.1} parent=0
    _
  %s8 = ssub.s32 1, %s6
  %s9 = scalar_select 0, %s8, %s6
  $region1: #{tpu_custom_call.1} parent=0
    #allocation3 [shape = 'u8[32768]{0}', space=vmem, size = 0x8000, scoped, tag = 'input window, operand 0, single buffered']
    #allocation4 [shape = 's32[1]{0}', space=sflag, size = 0x4, scoped, tag = 'scoped memory for tpu_custom_call.1']
    #allocation5 [shape = 's32[1]{0}', space=sflag, size = 0x4, scoped, tag = 'scoped memory for tpu_custom_call.1']
    #allocation6 [shape = 'u8[32768]{0}', space=vmem, size = 0x8000, scoped, tag = 'input window, operand 1, single buffered']
    #allocation7 [shape = 's32[1]{0}', space=sflag, size = 0x4, scoped, tag = 'scoped memory for tpu_custom_call.1']
    #allocation8 [shape = 'u8[65536]{0}', space=vmem, size = 0x10000, scoped, tag = 'input window, operand 2, single buffered']
    #allocation9 [shape = 'u8[65536]{0}', space=vmem, size = 0x10000, scoped, tag = 'input window, operand 4, single buffered']
    #allocation10 [shape = 's32[1]{0}', space=sflag, size = 0x4, scoped, tag = 'scoped memory for tpu_custom_call.1']
    #allocation11 [shape = 'u8[32768]{0}', space=vmem, size = 0x8000, scoped, tag = 'output window, operand 0, single buffered']
    %10 = vsyncpa [#allocation4], 0
    %11 = vsyncpa [#allocation7], 0
    %12 = vsyncpa [#allocation10], 0
    %13 = vsyncpa [#allocation5], 0
    // Predicated region
    $region2: #{tpu_custom_call.1} parent=1 // pred_check
      _
    $region3: #{tpu_custom_call.1} parent=1 // pred_check_branch
      %15 = sbr.rel (0) target = $region5
    $region4: #{tpu_custom_call.1} parent=1 // pred_region
      %s17 = ssub.s32 1024, 1024
      %18 = vsyncadd [#allocation4], %s17
      %s19 = sshll.u32 [#allocation3], 4
      %s20 = int_to_ptr.vmem [resolvable:$true] %s19
      %25 = dma.hbm_to_vmem [thread:$0]  %s0, 1024, %s20, [#allocation4], 64, 64, 4
    $region5: #{tpu_custom_call.1} parent=1 // pred_fallthru
      _
    // Predicated region
    $region6: #{tpu_custom_call.1} parent=1 // pred_check
      _
    $region7: #{tpu_custom_call.1} parent=1 // pred_check_branch
      %27 = sbr.rel (0) target = $region9
    $region8: #{tpu_custom_call.1} parent=1 // pred_region
      %s29 = ssub.s32 1024, 1024
      %30 = vsyncadd [#allocation7], %s29
      %s31 = sshll.u32 [#allocation6], 4
      %s32 = int_to_ptr.vmem [resolvable:$true] %s31
      %37 = dma.hbm_to_vmem [thread:$0]  %s1, 1024, %s32, [#allocation7], 64, 64, 4
    $region9: #{tpu_custom_call.1} parent=1 // pred_fallthru
      _
    // Predicated region
    $region10: #{tpu_custom_call.1} parent=1 // pred_check
      _
    $region11: #{tpu_custom_call.1} parent=1 // pred_check_branch
      %39 = sbr.rel (0) target = $region13
    $region12: #{tpu_custom_call.1} parent=1 // pred_region
      %s41 = ssub.s32 2048, 2048
      %42 = vsyncadd [#allocation7], %s41
      %s43 = sshll.u32 [#allocation8], 4
      %s44 = int_to_ptr.vmem [resolvable:$true] %s43
      %49 = dma.hbm_to_vmem [thread:$0]  %s2, 2048, %s44, [#allocation7], 128, 128, 8
    $region13: #{tpu_custom_call.1} parent=1 // pred_fallthru
      _
    // Predicated region
    $region14: #{tpu_custom_call.1} parent=1 // pred_check
      _
    $region15: #{tpu_custom_call.1} parent=1 // pred_check_branch
      %51 = sbr.rel (0) target = $region17
    $region16: #{tpu_custom_call.1} parent=1 // pred_region
      _
    $region17: #{tpu_custom_call.1} parent=1 // pred_fallthru
      _
    // Predicated region
    $region18: #{tpu_custom_call.1} parent=1 // pred_check
      _
    $region19: #{tpu_custom_call.1} parent=1 // pred_check_branch
      %53 = sbr.rel (0) target = $region21
    $region20: #{tpu_custom_call.1} parent=1 // pred_region
      %s55 = ssub.s32 2048, 2048
      %56 = vsyncadd [#allocation10], %s55
      %s57 = sshll.u32 [#allocation9], 4
      %s58 = int_to_ptr.vmem [resolvable:$true] %s57
      %63 = dma.hbm_to_vmem [thread:$0]  %s4, 2048, %s58, [#allocation10], 128, 128, 8
    $region21: #{tpu_custom_call.1} parent=1 // pred_fallthru
      _
    // Predicated region
    $region22: #{tpu_custom_call.1} parent=1 // pred_check
      _
    $region23: #{tpu_custom_call.1} parent=1 // pred_check_branch
      %65 = sbr.rel (0) target = $region25
    $region24: #{tpu_custom_call.1} parent=1 // pred_region
      %66 = dma.done [#allocation4], 1024
    $region25: #{tpu_custom_call.1} parent=1 // pred_fallthru
      _
    // Predicated region
    $region26: #{tpu_custom_call.1} parent=1 // pred_check
      _
    $region27: #{tpu_custom_call.1} parent=1 // pred_check_branch
      %68 = sbr.rel (0) target = $region29
    $region28: #{tpu_custom_call.1} parent=1 // pred_region
      %69 = dma.done [#allocation7], 1024
    $region29: #{tpu_custom_call.1} parent=1 // pred_fallthru
      _
    // Predicated region
    $region30: #{tpu_custom_call.1} parent=1 // pred_check
      _
    $region31: #{tpu_custom_call.1} parent=1 // pred_check_branch
      %71 = sbr.rel (0) target = $region33
    $region32: #{tpu_custom_call.1} parent=1 // pred_region
      %72 = dma.done [#allocation7], 2048
    $region33: #{tpu_custom_call.1} parent=1 // pred_fallthru
      _
    // Predicated region
    $region34: #{tpu_custom_call.1} parent=1 // pred_check
      _
    $region35: #{tpu_custom_call.1} parent=1 // pred_check_branch
      %74 = sbr.rel (0) target = $region37
    $region36: #{tpu_custom_call.1} parent=1 // pred_region
      %75 = dma.done [#allocation10], 2048
    $region37: #{tpu_custom_call.1} parent=1 // pred_fallthru
      _
    %p77 = scmp.eq.s32.totalorder 0, 0
    // Predicated region
    $region38: #{tpu_custom_call.1} parent=1 // pred_check
      %p78 = pneg %p77
    $region39: #{tpu_custom_call.1} parent=1 // pred_check_branch
      %80 = sbr.rel (%p78) target = $region41
    $region40: #{tpu_custom_call.1} parent=1 // pred_region
      %81 = vst [vmem:[#allocation2] sm:$0xff] 0.0
      %82 = vst [vmem:[#allocation2 + $0x8] sm:$0xff] 0.0
      %83 = vst [vmem:[#allocation2 + $0x10] sm:$0xff] 0.0
      %84 = vst [vmem:[#allocation2 + $0x18] sm:$0xff] 0.0
      %85 = vst [vmem:[#allocation2 + $0x20] sm:$0xff] 0.0
      %86 = vst [vmem:[#allocation2 + $0x28] sm:$0xff] 0.0
      %87 = vst [vmem:[#allocation2 + $0x30] sm:$0xff] 0.0
      %88 = vst [vmem:[#allocation2 + $0x38] sm:$0xff] 0.0
      %89 = vst [vmem:[#allocation2 + $0x40] sm:$0xff] 0.0
      %90 = vst [vmem:[#allocation2 + $0x48] sm:$0xff] 0.0
      %91 = vst [vmem:[#allocation2 + $0x50] sm:$0xff] 0.0
      %92 = vst [vmem:[#allocation2 + $0x58] sm:$0xff] 0.0
      %93 = vst [vmem:[#allocation2 + $0x60] sm:$0xff] 0.0
      %94 = vst [vmem:[#allocation2 + $0x68] sm:$0xff] 0.0
      %95 = vst [vmem:[#allocation2 + $0x70] sm:$0xff] 0.0
      %96 = vst [vmem:[#allocation2 + $0x78] sm:$0xff] 0.0
    $region41: #{tpu_custom_call.1} parent=1 // pred_fallthru
      _
    %s97 = smul.u32 0, 128
    %s98 = sshra.s32 %s97, 3
    %s99 = sand.u32 %s97, 7
    %s100 = smul.addr %s98, 4
    %s101 = scalar_lea.vmem [#allocation6], %s100
    %v102 = vld [vmem:[%s101] sm:$0xf]
    %v103 = vld [vmem:[%s101 + $0x4] sm:$0xf]
    %v104 = vld [vmem:[%s101 + $0x8] sm:$0xf]
    %v105 = vld [vmem:[%s101 + $0xc] sm:$0xf]
    %v106 = vld [vmem:[%s101 + $0x10] sm:$0xf]
    %v107 = vld [vmem:[%s101 + $0x14] sm:$0xf]
    %v108 = vld [vmem:[%s101 + $0x18] sm:$0xf]
    %v109 = vld [vmem:[%s101 + $0x1c] sm:$0xf]
    %v110 = vld [vmem:[%s101 + $0x20] sm:$0xf]
    %v111 = vld [vmem:[%s101 + $0x24] sm:$0xf]
    %v112 = vld [vmem:[%s101 + $0x28] sm:$0xf]
    %v113 = vld [vmem:[%s101 + $0x2c] sm:$0xf]
    %v114 = vld [vmem:[%s101 + $0x30] sm:$0xf]
    %v115 = vld [vmem:[%s101 + $0x34] sm:$0xf]
    %v116 = vld [vmem:[%s101 + $0x38] sm:$0xf]
    %v117 = vld [vmem:[%s101 + $0x3c] sm:$0xf]
    %v118 = vld [vmem:[#allocation2] sm:$0xff]
    %v119 = vld [vmem:[#allocation2 + $0x8] sm:$0xff]
    %v120 = vld [vmem:[#allocation2 + $0x10] sm:$0xff]
    %v121 = vld [vmem:[#allocation2 + $0x18] sm:$0xff]
    %v122 = vld [vmem:[#allocation2 + $0x20] sm:$0xff]
    %v123 = vld [vmem:[#allocation2 + $0x28] sm:$0xff]
    %v124 = vld [vmem:[#allocation2 + $0x30] sm:$0xff]
    %v125 = vld [vmem:[#allocation2 + $0x38] sm:$0xff]
    %v126 = vld [vmem:[#allocation2 + $0x40] sm:$0xff]
    %v127 = vld [vmem:[#allocation2 + $0x48] sm:$0xff]
    %v128 = vld [vmem:[#allocation2 + $0x50] sm:$0xff]
    %v129 = vld [vmem:[#allocation2 + $0x58] sm:$0xff]
    %v130 = vld [vmem:[#allocation2 + $0x60] sm:$0xff]
    %v131 = vld [vmem:[#allocation2 + $0x68] sm:$0xff]
    %v132 = vld [vmem:[#allocation2 + $0x70] sm:$0xff]
    %v133 = vld [vmem:[#allocation2 + $0x78] sm:$0xff]
    %v134 = vld [vmem:[#allocation3] sm:$0xf]
    %v135 = vld [vmem:[#allocation3 + $0x4] sm:$0xf]
    %v136 = vld [vmem:[#allocation3 + $0x8] sm:$0xf]
    %v137 = vld [vmem:[#allocation3 + $0xc] sm:$0xf]
    %v138 = vld [vmem:[#allocation3 + $0x10] sm:$0xf]
    %v139 = vld [vmem:[#allocation3 + $0x14] sm:$0xf]
    %v140 = vld [vmem:[#allocation3 + $0x18] sm:$0xf]
    %v141 = vld [vmem:[#allocation3 + $0x1c] sm:$0xf]
    %v142 = vld [vmem:[#allocation3 + $0x20] sm:$0xf]
    %v143 = vld [vmem:[#allocation3 + $0x24] sm:$0xf]
    %v144 = vld [vmem:[#allocation3 + $0x28] sm:$0xf]
    %v145 = vld [vmem:[#allocation3 + $0x2c] sm:$0xf]
    %v146 = vld [vmem:[#allocation3 + $0x30] sm:$0xf]
    %v147 = vld [vmem:[#allocation3 + $0x34] sm:$0xf]
    %v148 = vld [vmem:[#allocation3 + $0x38] sm:$0xf]
    %v149 = vld [vmem:[#allocation3 + $0x3c] sm:$0xf]
    %v166 = vunpack.c.l.b16 %v134
    %v167 = vunpack.c.l.b16 %v135
    %v168 = vunpack.c.l.b16 %v136
    %v169 = vunpack.c.l.b16 %v137
    %v170 = vunpack.c.l.b16 %v138
    %v171 = vunpack.c.l.b16 %v139
    %v172 = vunpack.c.l.b16 %v140
    %v173 = vunpack.c.l.b16 %v141
    %v174 = vunpack.c.l.b16 %v142
    %v175 = vunpack.c.l.b16 %v143
    %v176 = vunpack.c.l.b16 %v144
    %v177 = vunpack.c.l.b16 %v145
    %v178 = vunpack.c.l.b16 %v146
    %v179 = vunpack.c.l.b16 %v147
    %v180 = vunpack.c.l.b16 %v148
    %v181 = vunpack.c.l.b16 %v149
    %v182 = vpack.c.b16 %v167, %v166
    %v183 = vpack.c.b16 %v169, %v168
    %v184 = vpack.c.b16 %v171, %v170
    %v185 = vpack.c.b16 %v173, %v172
    %v186 = vpack.c.b16 %v175, %v174
    %v187 = vpack.c.b16 %v177, %v176
    %v188 = vpack.c.b16 %v179, %v178
    %v189 = vpack.c.b16 %v181, %v180
    %v214 = vunpack.c.l.b16 %v102
    %v215 = vunpack.c.l.b16 %v103
    %v216 = vunpack.c.l.b16 %v104
    %v217 = vunpack.c.l.b16 %v105
    %v218 = vunpack.c.l.b16 %v106
    %v219 = vunpack.c.l.b16 %v107
    %v220 = vunpack.c.l.b16 %v108
    %v221 = vunpack.c.l.b16 %v109
    %v222 = vunpack.c.l.b16 %v110
    %v223 = vunpack.c.l.b16 %v111
    %v224 = vunpack.c.l.b16 %v112
    %v225 = vunpack.c.l.b16 %v113
    %v226 = vunpack.c.l.b16 %v114
    %v227 = vunpack.c.l.b16 %v115
    %v228 = vunpack.c.l.b16 %v116
    %v229 = vunpack.c.l.b16 %v117
    %v230 = vpack.c.b16 %v215, %v214
    %v231 = vpack.c.b16 %v217, %v216
    %v232 = vpack.c.b16 %v219, %v218
    %v233 = vpack.c.b16 %v221, %v220
    %v234 = vpack.c.b16 %v223, %v222
    %v235 = vpack.c.b16 %v225, %v224
    %v236 = vpack.c.b16 %v227, %v226
    %v237 = vpack.c.b16 %v229, %v228
    %246 = vmatprep.subr.bf16.mxu0 0
    %247 = vmatpush1.bf16.msra.mxu0 %v237
    %248 = vmatprep.subr.bf16.mxu0 0
    %249 = vmatpush1.bf16.msra.mxu0 %v236
    %250 = vmatprep.subr.bf16.mxu0 0
    %251 = vmatpush1.bf16.msra.mxu0 %v235
    %252 = vmatprep.subr.bf16.mxu0 0
    %253 = vmatpush1.bf16.msra.mxu0 %v234
    %254 = vmatprep.subr.bf16.mxu0 0
    %255 = vmatpush1.bf16.msra.mxu0 %v233
    %256 = vmatprep.subr.bf16.mxu0 0
    %257 = vmatpush1.bf16.msra.mxu0 %v232
    %258 = vmatprep.subr.bf16.mxu0 0
    %259 = vmatpush1.bf16.msra.mxu0 %v231
    %260 = vmatprep.subr.bf16.mxu0 0
    %261 = vmatpush1.bf16.msra.mxu0 %v230
    %262 = vmatprep.subr.bf16.mxu0 0
    %263 = vmatpush2.bf16.msra.mxu0 0
    %264 = vmatprep.subr.bf16.mxu0 0
    %265 = vmatpush2.bf16.msra.mxu0 0
    %266 = vmatprep.subr.bf16.mxu0 0
    %267 = vmatpush2.bf16.msra.mxu0 0
    %268 = vmatprep.subr.bf16.mxu0 0
    %269 = vmatpush2.bf16.msra.mxu0 0
    %270 = vmatprep.subr.bf16.mxu0 0
    %271 = vmatpush2.bf16.msra.mxu0 0
    %272 = vmatprep.subr.bf16.mxu0 0
    %273 = vmatpush2.bf16.msra.mxu0 0
    %274 = vmatprep.subr.bf16.mxu0 0
    %275 = vmatpush2.bf16.msra.mxu0 0
    %276 = vmatprep.subr.bf16.mxu0 0
    %277 = vmatpush2.bf16.msra.mxu0 0
    %278 = vmatprep.mubr.bf16.mxu0 0
    %279 = vmatmul.mubr.bf16.gmra.mxu0 %v182
    %v280 = vpop.f32.mrf.mxu0
    %v281 = vadd.f32 0.0, %v280
    %v282 = vpop.f32.mrf.mxu0
    %v283 = vpop.f32.mrf.mxu0
    %v284 = vadd.f32 0.0, %v283
    %v285 = vpop.f32.mrf.mxu0
    %286 = vmatprep.mubr.bf16.mxu0 0
    %287 = vmatmul.mubr.bf16.gmra.mxu0 %v183
    %v288 = vpop.f32.mrf.mxu0
    %v289 = vadd.f32 0.0, %v288
    %v290 = vpop.f32.mrf.mxu0
    %v291 = vpop.f32.mrf.mxu0
    %v292 = vadd.f32 0.0, %v291
    %v293 = vpop.f32.mrf.mxu0
    %294 = vmatprep.mubr.bf16.mxu0 0
    %295 = vmatmul.mubr.bf16.gmra.mxu0 %v184
    %v296 = vpop.f32.mrf.mxu0
    %v297 = vadd.f32 0.0, %v296
    %v298 = vpop.f32.mrf.mxu0
    %v299 = vpop.f32.mrf.mxu0
    %v300 = vadd.f32 0.0, %v299
    %v301 = vpop.f32.mrf.mxu0
    %302 = vmatprep.mubr.bf16.mxu0 0
    %303 = vmatmul.mubr.bf16.gmra.mxu0 %v185
    %v304 = vpop.f32.mrf.mxu0
    %v305 = vadd.f32 0.0, %v304
    %v306 = vpop.f32.mrf.mxu0
    %v307 = vpop.f32.mrf.mxu0
    %v308 = vadd.f32 0.0, %v307
    %v309 = vpop.f32.mrf.mxu0
    %310 = vmatprep.mubr.bf16.mxu0 0
    %311 = vmatmul.mubr.bf16.gmra.mxu0 %v186
    %v312 = vpop.f32.mrf.mxu0
    %v313 = vadd.f32 0.0, %v312
    %v314 = vpop.f32.mrf.mxu0
    %v315 = vpop.f32.mrf.mxu0
    %v316 = vadd.f32 0.0, %v315
    %v317 = vpop.f32.mrf.mxu0
    %318 = vmatprep.mubr.bf16.mxu0 0
    %319 = vmatmul.mubr.bf16.gmra.mxu0 %v187
    %v320 = vpop.f32.mrf.mxu0
    %v321 = vadd.f32 0.0, %v320
    %v322 = vpop.f32.mrf.mxu0
    %v323 = vpop.f32.mrf.mxu0
    %v324 = vadd.f32 0.0, %v323
    %v325 = vpop.f32.mrf.mxu0
    %326 = vmatprep.mubr.bf16.mxu0 0
    %327 = vmatmul.mubr.bf16.gmra.mxu0 %v188
    %v328 = vpop.f32.mrf.mxu0
    %v329 = vadd.f32 0.0, %v328
    %v330 = vpop.f32.mrf.mxu0
    %v331 = vpop.f32.mrf.mxu0
    %v332 = vadd.f32 0.0, %v331
    %v333 = vpop.f32.mrf.mxu0
    %334 = vmatprep.mubr.bf16.mxu0 0
    %335 = vmatmul.mubr.bf16.gmra.mxu0 %v189
    %v336 = vpop.f32.mrf.mxu0
    %v337 = vadd.f32 0.0, %v336
    %v338 = vpop.f32.mrf.mxu0
    %v339 = vpop.f32.mrf.mxu0
    %v340 = vadd.f32 0.0, %v339
    %v341 = vpop.f32.mrf.mxu0
    %342 = vdwg.mxu0
    %v343 = vadd.f32 %v118, %v281
    %v344 = vadd.f32 %v119, %v284
    %v345 = vadd.f32 %v120, %v289
    %v346 = vadd.f32 %v121, %v292
    %v347 = vadd.f32 %v122, %v297
    %v348 = vadd.f32 %v123, %v300
    %v349 = vadd.f32 %v124, %v305
    %v350 = vadd.f32 %v125, %v308
    %v351 = vadd.f32 %v126, %v313
    %v352 = vadd.f32 %v127, %v316
    %v353 = vadd.f32 %v128, %v321
    %v354 = vadd.f32 %v129, %v324
    %v355 = vadd.f32 %v130, %v329
    %v356 = vadd.f32 %v131, %v332
    %v357 = vadd.f32 %v132, %v337
    %v358 = vadd.f32 %v133, %v340
    %359 = vst [vmem:[#allocation2] sm:$0xff] %v343
    %360 = vst [vmem:[#allocation2 + $0x8] sm:$0xff] %v344
    %361 = vst [vmem:[#allocation2 + $0x10] sm:$0xff] %v345
    %362 = vst [vmem:[#allocation2 + $0x18] sm:$0xff] %v346
    %363 = vst [vmem:[#allocation2 + $0x20] sm:$0xff] %v347
    %364 = vst [vmem:[#allocation2 + $0x28] sm:$0xff] %v348
    %365 = vst [vmem:[#allocation2 + $0x30] sm:$0xff] %v349
    %366 = vst [vmem:[#allocation2 + $0x38] sm:$0xff] %v350
    %367 = vst [vmem:[#allocation2 + $0x40] sm:$0xff] %v351
    %368 = vst [vmem:[#allocation2 + $0x48] sm:$0xff] %v352
    %369 = vst [vmem:[#allocation2 + $0x50] sm:$0xff] %v353
    %370 = vst [vmem:[#allocation2 + $0x58] sm:$0xff] %v354
    %371 = vst [vmem:[#allocation2 + $0x60] sm:$0xff] %v355
    %372 = vst [vmem:[#allocation2 + $0x68] sm:$0xff] %v356
    %373 = vst [vmem:[#allocation2 + $0x70] sm:$0xff] %v357
    %374 = vst [vmem:[#allocation2 + $0x78] sm:$0xff] %v358
    // Predicated region
    $region42: #{tpu_custom_call.1} parent=1 // pred_check
      %p375 = pneg %p77
    $region43: #{tpu_custom_call.1} parent=1 // pred_check_branch
      %377 = sbr.rel (%p375) target = $region45
    $region44: #{tpu_custom_call.1} parent=1 // pred_region
      %v378 = vld [vmem:[#allocation2] sm:$0xff]
      %v379 = vld [vmem:[#allocation2 + $0x8] sm:$0xff]
      %v380 = vld [vmem:[#allocation2 + $0x10] sm:$0xff]
      %v381 = vld [vmem:[#allocation2 + $0x18] sm:$0xff]
      %v382 = vld [vmem:[#allocation2 + $0x20] sm:$0xff]
      %v383 = vld [vmem:[#allocation2 + $0x28] sm:$0xff]
      %v384 = vld [vmem:[#allocation2 + $0x30] sm:$0xff]
      %v385 = vld [vmem:[#allocation2 + $0x38] sm:$0xff]
      %v386 = vld [vmem:[#allocation2 + $0x40] sm:$0xff]
      %v387 = vld [vmem:[#allocation2 + $0x48] sm:$0xff]
      %v388 = vld [vmem:[#allocation2 + $0x50] sm:$0xff]
      %v389 = vld [vmem:[#allocation2 + $0x58] sm:$0xff]
      %v390 = vld [vmem:[#allocation2 + $0x60] sm:$0xff]
      %v391 = vld [vmem:[#allocation2 + $0x68] sm:$0xff]
      %v392 = vld [vmem:[#allocation2 + $0x70] sm:$0xff]
      %v393 = vld [vmem:[#allocation2 + $0x78] sm:$0xff]
      %v394 = vld [vmem:[#allocation8] sm:$0xff]
      %v395 = vld [vmem:[#allocation8 + $0x8] sm:$0xff]
      %v396 = vld [vmem:[#allocation8 + $0x10] sm:$0xff]
      %v397 = vld [vmem:[#allocation8 + $0x18] sm:$0xff]
      %v398 = vld [vmem:[#allocation8 + $0x20] sm:$0xff]
      %v399 = vld [vmem:[#allocation8 + $0x28] sm:$0xff]
      %v400 = vld [vmem:[#allocation8 + $0x30] sm:$0xff]
      %v401 = vld [vmem:[#allocation8 + $0x38] sm:$0xff]
      %v402 = vld [vmem:[#allocation8 + $0x40] sm:$0xff]
      %v403 = vld [vmem:[#allocation8 + $0x48] sm:$0xff]
      %v404 = vld [vmem:[#allocation8 + $0x50] sm:$0xff]
      %v405 = vld [vmem:[#allocation8 + $0x58] sm:$0xff]
      %v406 = vld [vmem:[#allocation8 + $0x60] sm:$0xff]
      %v407 = vld [vmem:[#allocation8 + $0x68] sm:$0xff]
      %v408 = vld [vmem:[#allocation8 + $0x70] sm:$0xff]
      %v409 = vld [vmem:[#allocation8 + $0x78] sm:$0xff]
      %v410 = vld [vmem:[%s3] sm:$0x1]
      %v412 = vlaneseq
      %v413 = vshrl.u32 %v412, 7
      %v414 = vsub.s32 0, %v413
      %v415 = vrot.slane %v410, %v414
      %417 = vmatprep.subr.mxu0 0.0
      %418 = vmatpush1.msra.mxu0 %v409
      %419 = vmatprep.subr.mxu0 0.0
      %420 = vmatpush1.msra.mxu0 %v408
      %421 = vmatprep.subr.mxu0 0.0
      %422 = vmatpush1.msra.mxu0 %v407
      %423 = vmatprep.subr.mxu0 0.0
      %424 = vmatpush1.msra.mxu0 %v406
      %425 = vmatprep.subr.mxu0 0.0
      %426 = vmatpush1.msra.mxu0 %v405
      %427 = vmatprep.subr.mxu0 0.0
      %428 = vmatpush1.msra.mxu0 %v404
      %429 = vmatprep.subr.mxu0 0.0
      %430 = vmatpush1.msra.mxu0 %v403
      %431 = vmatprep.subr.mxu0 0.0
      %432 = vmatpush1.msra.mxu0 %v402
      %433 = vmatprep.subr.mxu0 0.0
      %434 = vmatpush1.msra.mxu0 %v401
      %435 = vmatprep.subr.mxu0 0.0
      %436 = vmatpush1.msra.mxu0 %v400
      %437 = vmatprep.subr.mxu0 0.0
      %438 = vmatpush1.msra.mxu0 %v399
      %439 = vmatprep.subr.mxu0 0.0
      %440 = vmatpush1.msra.mxu0 %v398
      %441 = vmatprep.subr.mxu0 0.0
      %442 = vmatpush1.msra.mxu0 %v397
      %443 = vmatprep.subr.mxu0 0.0
      %444 = vmatpush1.msra.mxu0 %v396
      %445 = vmatprep.subr.mxu0 0.0
      %446 = vmatpush1.msra.mxu0 %v395
      %447 = vmatprep.subr.mxu0 0.0
      %448 = vmatpush1.msra.mxu0 %v394
      %449 = vmatprep.subr.mxu0 0.0
      %450 = vmatpush2.msra.mxu0 0.0
      %451 = vmatprep.subr.mxu0 0.0
      %452 = vmatpush2.msra.mxu0 0.0
      %453 = vmatprep.subr.mxu0 0.0
      %454 = vmatpush2.msra.mxu0 0.0
      %455 = vmatprep.subr.mxu0 0.0
      %456 = vmatpush2.msra.mxu0 0.0
      %457 = vmatprep.subr.mxu0 0.0
      %458 = vmatpush2.msra.mxu0 0.0
      %459 = vmatprep.subr.mxu0 0.0
      %460 = vmatpush2.msra.mxu0 0.0
      %461 = vmatprep.subr.mxu0 0.0
      %462 = vmatpush2.msra.mxu0 0.0
      %463 = vmatprep.subr.mxu0 0.0
      %464 = vmatpush2.msra.mxu0 0.0
      %465 = vmatprep.subr.mxu0 0.0
      %466 = vmatpush2.msra.mxu0 0.0
      %467 = vmatprep.subr.mxu0 0.0
      %468 = vmatpush2.msra.mxu0 0.0
      %469 = vmatprep.subr.mxu0 0.0
      %470 = vmatpush2.msra.mxu0 0.0
      %471 = vmatprep.subr.mxu0 0.0
      %472 = vmatpush2.msra.mxu0 0.0
      %473 = vmatprep.subr.mxu0 0.0
      %474 = vmatpush2.msra.mxu0 0.0
      %475 = vmatprep.subr.mxu0 0.0
      %476 = vmatpush2.msra.mxu0 0.0
      %477 = vmatprep.subr.mxu0 0.0
      %478 = vmatpush2.msra.mxu0 0.0
      %479 = vmatprep.subr.mxu0 0.0
      %480 = vmatpush2.msra.mxu0 0.0
      %481 = vmatprep.mubr.f32.mxu0 0.0
      %482 = vmatmul.mubr.f32.gmra.mxu0 %v378
      %v483 = vpop.f32.mrf.mxu0
      %v484 = vadd.f32 %v415, %v483
      %v485 = vpop.f32.mrf.mxu0
      %486 = vmatprep.mubr.f32.mxu0 0.0
      %487 = vmatmul.mubr.f32.gmra.mxu0 %v379
      %v488 = vpop.f32.mrf.mxu0
      %v489 = vadd.f32 %v415, %v488
      %v490 = vpop.f32.mrf.mxu0
      %491 = vmatprep.mubr.f32.mxu0 0.0
      %492 = vmatmul.mubr.f32.gmra.mxu0 %v380
      %v493 = vpop.f32.mrf.mxu0
      %v494 = vadd.f32 %v415, %v493
      %v495 = vpop.f32.mrf.mxu0
      %496 = vmatprep.mubr.f32.mxu0 0.0
      %497 = vmatmul.mubr.f32.gmra.mxu0 %v381
      %v498 = vpop.f32.mrf.mxu0
      %v499 = vadd.f32 %v415, %v498
      %v500 = vpop.f32.mrf.mxu0
      %501 = vmatprep.mubr.f32.mxu0 0.0
      %502 = vmatmul.mubr.f32.gmra.mxu0 %v382
      %v503 = vpop.f32.mrf.mxu0
      %v504 = vadd.f32 %v415, %v503
      %v505 = vpop.f32.mrf.mxu0
      %506 = vmatprep.mubr.f32.mxu0 0.0
      %507 = vmatmul.mubr.f32.gmra.mxu0 %v383
      %v508 = vpop.f32.mrf.mxu0
      %v509 = vadd.f32 %v415, %v508
      %v510 = vpop.f32.mrf.mxu0
      %511 = vmatprep.mubr.f32.mxu0 0.0
      %512 = vmatmul.mubr.f32.gmra.mxu0 %v384
      %v513 = vpop.f32.mrf.mxu0
      %v514 = vadd.f32 %v415, %v513
      %v515 = vpop.f32.mrf.mxu0
      %516 = vmatprep.mubr.f32.mxu0 0.0
      %517 = vmatmul.mubr.f32.gmra.mxu0 %v385
      %v518 = vpop.f32.mrf.mxu0
      %v519 = vadd.f32 %v415, %v518
      %v520 = vpop.f32.mrf.mxu0
      %521 = vmatprep.mubr.f32.mxu0 0.0
      %522 = vmatmul.mubr.f32.gmra.mxu0 %v386
      %v523 = vpop.f32.mrf.mxu0
      %v524 = vadd.f32 %v415, %v523
      %v525 = vpop.f32.mrf.mxu0
      %526 = vmatprep.mubr.f32.mxu0 0.0
      %527 = vmatmul.mubr.f32.gmra.mxu0 %v387
      %v528 = vpop.f32.mrf.mxu0
      %v529 = vadd.f32 %v415, %v528
      %v530 = vpop.f32.mrf.mxu0
      %531 = vmatprep.mubr.f32.mxu0 0.0
      %532 = vmatmul.mubr.f32.gmra.mxu0 %v388
      %v533 = vpop.f32.mrf.mxu0
      %v534 = vadd.f32 %v415, %v533
      %v535 = vpop.f32.mrf.mxu0
      %536 = vmatprep.mubr.f32.mxu0 0.0
      %537 = vmatmul.mubr.f32.gmra.mxu0 %v389
      %v538 = vpop.f32.mrf.mxu0
      %v539 = vadd.f32 %v415, %v538
      %v540 = vpop.f32.mrf.mxu0
      %541 = vmatprep.mubr.f32.mxu0 0.0
      %542 = vmatmul.mubr.f32.gmra.mxu0 %v390
      %v543 = vpop.f32.mrf.mxu0
      %v544 = vadd.f32 %v415, %v543
      %v545 = vpop.f32.mrf.mxu0
      %546 = vmatprep.mubr.f32.mxu0 0.0
      %547 = vmatmul.mubr.f32.gmra.mxu0 %v391
      %v548 = vpop.f32.mrf.mxu0
      %v549 = vadd.f32 %v415, %v548
      %v550 = vpop.f32.mrf.mxu0
      %551 = vmatprep.mubr.f32.mxu0 0.0
      %552 = vmatmul.mubr.f32.gmra.mxu0 %v392
      %v553 = vpop.f32.mrf.mxu0
      %v554 = vadd.f32 %v415, %v553
      %v555 = vpop.f32.mrf.mxu0
      %556 = vmatprep.mubr.f32.mxu0 0.0
      %557 = vmatmul.mubr.f32.gmra.mxu0 %v393
      %v558 = vpop.f32.mrf.mxu0
      %v559 = vadd.f32 %v415, %v558
      %v560 = vpop.f32.mrf.mxu0
      %561 = vdwg.mxu0
      %v562 = vmax.f32 %v484, 0.0
      %v563 = vmax.f32 %v489, 0.0
      %v564 = vmax.f32 %v494, 0.0
      %v565 = vmax.f32 %v499, 0.0
      %v566 = vmax.f32 %v504, 0.0
      %v567 = vmax.f32 %v509, 0.0
      %v568 = vmax.f32 %v514, 0.0
      %v569 = vmax.f32 %v519, 0.0
      %v570 = vmax.f32 %v524, 0.0
      %v571 = vmax.f32 %v529, 0.0
      %v572 = vmax.f32 %v534, 0.0
      %v573 = vmax.f32 %v539, 0.0
      %v574 = vmax.f32 %v544, 0.0
      %v575 = vmax.f32 %v549, 0.0
      %v576 = vmax.f32 %v554, 0.0
      %v577 = vmax.f32 %v559, 0.0
      %v578 = vld [vmem:[#allocation9] sm:$0xff]
      %v579 = vld [vmem:[#allocation9 + $0x8] sm:$0xff]
      %v580 = vld [vmem:[#allocation9 + $0x10] sm:$0xff]
      %v581 = vld [vmem:[#allocation9 + $0x18] sm:$0xff]
      %v582 = vld [vmem:[#allocation9 + $0x20] sm:$0xff]
      %v583 = vld [vmem:[#allocation9 + $0x28] sm:$0xff]
      %v584 = vld [vmem:[#allocation9 + $0x30] sm:$0xff]
      %v585 = vld [vmem:[#allocation9 + $0x38] sm:$0xff]
      %v586 = vld [vmem:[#allocation9 + $0x40] sm:$0xff]
      %v587 = vld [vmem:[#allocation9 + $0x48] sm:$0xff]
      %v588 = vld [vmem:[#allocation9 + $0x50] sm:$0xff]
      %v589 = vld [vmem:[#allocation9 + $0x58] sm:$0xff]
      %v590 = vld [vmem:[#allocation9 + $0x60] sm:$0xff]
      %v591 = vld [vmem:[#allocation9 + $0x68] sm:$0xff]
      %v592 = vld [vmem:[#allocation9 + $0x70] sm:$0xff]
      %v593 = vld [vmem:[#allocation9 + $0x78] sm:$0xff]
      %594 = vmatprep.subr.mxu0 0.0
      %595 = vmatpush1.msra.mxu0 %v593
      %596 = vmatprep.subr.mxu0 0.0
      %597 = vmatpush1.msra.mxu0 %v592
      %598 = vmatprep.subr.mxu0 0.0
      %599 = vmatpush1.msra.mxu0 %v591
      %600 = vmatprep.subr.mxu0 0.0
      %601 = vmatpush1.msra.mxu0 %v590
      %602 = vmatprep.subr.mxu0 0.0
      %603 = vmatpush1.msra.mxu0 %v589
      %604 = vmatprep.subr.mxu0 0.0
      %605 = vmatpush1.msra.mxu0 %v588
      %606 = vmatprep.subr.mxu0 0.0
      %607 = vmatpush1.msra.mxu0 %v587
      %608 = vmatprep.subr.mxu0 0.0
      %609 = vmatpush1.msra.mxu0 %v586
      %610 = vmatprep.subr.mxu0 0.0
      %611 = vmatpush1.msra.mxu0 %v585
      %612 = vmatprep.subr.mxu0 0.0
      %613 = vmatpush1.msra.mxu0 %v584
      %614 = vmatprep.subr.mxu0 0.0
      %615 = vmatpush1.msra.mxu0 %v583
      %616 = vmatprep.subr.mxu0 0.0
      %617 = vmatpush1.msra.mxu0 %v582
      %618 = vmatprep.subr.mxu0 0.0
      %619 = vmatpush1.msra.mxu0 %v581
      %620 = vmatprep.subr.mxu0 0.0
      %621 = vmatpush1.msra.mxu0 %v580
      %622 = vmatprep.subr.mxu0 0.0
      %623 = vmatpush1.msra.mxu0 %v579
      %624 = vmatprep.subr.mxu0 0.0
      %625 = vmatpush1.msra.mxu0 %v578
      %626 = vmatprep.subr.mxu0 0.0
      %627 = vmatpush2.msra.mxu0 0.0
      %628 = vmatprep.subr.mxu0 0.0
      %629 = vmatpush2.msra.mxu0 0.0
      %630 = vmatprep.subr.mxu0 0.0
      %631 = vmatpush2.msra.mxu0 0.0
      %632 = vmatprep.subr.mxu0 0.0
      %633 = vmatpush2.msra.mxu0 0.0
      %634 = vmatprep.subr.mxu0 0.0
      %635 = vmatpush2.msra.mxu0 0.0
      %636 = vmatprep.subr.mxu0 0.0
      %637 = vmatpush2.msra.mxu0 0.0
      %638 = vmatprep.subr.mxu0 0.0
      %639 = vmatpush2.msra.mxu0 0.0
      %640 = vmatprep.subr.mxu0 0.0
      %641 = vmatpush2.msra.mxu0 0.0
      %642 = vmatprep.subr.mxu0 0.0
      %643 = vmatpush2.msra.mxu0 0.0
      %644 = vmatprep.subr.mxu0 0.0
      %645 = vmatpush2.msra.mxu0 0.0
      %646 = vmatprep.subr.mxu0 0.0
      %647 = vmatpush2.msra.mxu0 0.0
      %648 = vmatprep.subr.mxu0 0.0
      %649 = vmatpush2.msra.mxu0 0.0
      %650 = vmatprep.subr.mxu0 0.0
      %651 = vmatpush2.msra.mxu0 0.0
      %652 = vmatprep.subr.mxu0 0.0
      %653 = vmatpush2.msra.mxu0 0.0
      %654 = vmatprep.subr.mxu0 0.0
      %655 = vmatpush2.msra.mxu0 0.0
      %656 = vmatprep.subr.mxu0 0.0
      %657 = vmatpush2.msra.mxu0 0.0
      %658 = vmatprep.mubr.f32.mxu0 0.0
      %659 = vmatmul.mubr.f32.gmra.mxu0 %v562
      %v660 = vpop.f32.mrf.mxu0
      %v661 = vadd.f32 0.0, %v660
      %v662 = vpop.f32.mrf.mxu0
      %663 = vmatprep.mubr.f32.mxu0 0.0
      %664 = vmatmul.mubr.f32.gmra.mxu0 %v563
      %v665 = vpop.f32.mrf.mxu0
      %v666 = vadd.f32 0.0, %v665
      %v667 = vpop.f32.mrf.mxu0
      %668 = vmatprep.mubr.f32.mxu0 0.0
      %669 = vmatmul.mubr.f32.gmra.mxu0 %v564
      %v670 = vpop.f32.mrf.mxu0
      %v671 = vadd.f32 0.0, %v670
      %v672 = vpop.f32.mrf.mxu0
      %673 = vmatprep.mubr.f32.mxu0 0.0
      %674 = vmatmul.mubr.f32.gmra.mxu0 %v565
      %v675 = vpop.f32.mrf.mxu0
      %v676 = vadd.f32 0.0, %v675
      %v677 = vpop.f32.mrf.mxu0
      %678 = vmatprep.mubr.f32.mxu0 0.0
      %679 = vmatmul.mubr.f32.gmra.mxu0 %v566
      %v680 = vpop.f32.mrf.mxu0
      %v681 = vadd.f32 0.0, %v680
      %v682 = vpop.f32.mrf.mxu0
      %683 = vmatprep.mubr.f32.mxu0 0.0
      %684 = vmatmul.mubr.f32.gmra.mxu0 %v567
      %v685 = vpop.f32.mrf.mxu0
      %v686 = vadd.f32 0.0, %v685
      %v687 = vpop.f32.mrf.mxu0
      %688 = vmatprep.mubr.f32.mxu0 0.0
      %689 = vmatmul.mubr.f32.gmra.mxu0 %v568
      %v690 = vpop.f32.mrf.mxu0
      %v691 = vadd.f32 0.0, %v690
      %v692 = vpop.f32.mrf.mxu0
      %693 = vmatprep.mubr.f32.mxu0 0.0
      %694 = vmatmul.mubr.f32.gmra.mxu0 %v569
      %v695 = vpop.f32.mrf.mxu0
      %v696 = vadd.f32 0.0, %v695
      %v697 = vpop.f32.mrf.mxu0
      %698 = vmatprep.mubr.f32.mxu0 0.0
      %699 = vmatmul.mubr.f32.gmra.mxu0 %v570
      %v700 = vpop.f32.mrf.mxu0
      %v701 = vadd.f32 0.0, %v700
      %v702 = vpop.f32.mrf.mxu0
      %703 = vmatprep.mubr.f32.mxu0 0.0
      %704 = vmatmul.mubr.f32.gmra.mxu0 %v571
      %v705 = vpop.f32.mrf.mxu0
      %v706 = vadd.f32 0.0, %v705
      %v707 = vpop.f32.mrf.mxu0
      %708 = vmatprep.mubr.f32.mxu0 0.0
      %709 = vmatmul.mubr.f32.gmra.mxu0 %v572
      %v710 = vpop.f32.mrf.mxu0
      %v711 = vadd.f32 0.0, %v710
      %v712 = vpop.f32.mrf.mxu0
      %713 = vmatprep.mubr.f32.mxu0 0.0
      %714 = vmatmul.mubr.f32.gmra.mxu0 %v573
      %v715 = vpop.f32.mrf.mxu0
      %v716 = vadd.f32 0.0, %v715
      %v717 = vpop.f32.mrf.mxu0
      %718 = vmatprep.mubr.f32.mxu0 0.0
      %719 = vmatmul.mubr.f32.gmra.mxu0 %v574
      %v720 = vpop.f32.mrf.mxu0
      %v721 = vadd.f32 0.0, %v720
      %v722 = vpop.f32.mrf.mxu0
      %723 = vmatprep.mubr.f32.mxu0 0.0
      %724 = vmatmul.mubr.f32.gmra.mxu0 %v575
      %v725 = vpop.f32.mrf.mxu0
      %v726 = vadd.f32 0.0, %v725
      %v727 = vpop.f32.mrf.mxu0
      %728 = vmatprep.mubr.f32.mxu0 0.0
      %729 = vmatmul.mubr.f32.gmra.mxu0 %v576
      %v730 = vpop.f32.mrf.mxu0
      %v731 = vadd.f32 0.0, %v730
      %v732 = vpop.f32.mrf.mxu0
      %733 = vmatprep.mubr.f32.mxu0 0.0
      %734 = vmatmul.mubr.f32.gmra.mxu0 %v577
      %v735 = vpop.f32.mrf.mxu0
      %v736 = vadd.f32 0.0, %v735
      %v737 = vpop.f32.mrf.mxu0
      %738 = vdwg.mxu0
      %v739 = vpack.c.bf16 %v666, %v661
      %v740 = vpack.c.bf16 %v676, %v671
      %v741 = vpack.c.bf16 %v686, %v681
      %v742 = vpack.c.bf16 %v696, %v691
      %v743 = vpack.c.bf16 %v706, %v701
      %v744 = vpack.c.bf16 %v716, %v711
      %v745 = vpack.c.bf16 %v726, %v721
      %v746 = vpack.c.bf16 %v736, %v731
      %v755 = vunpack.c.l.b16 %v739
      %v756 = vunpack.c.h.b16 %v739
      %v757 = vunpack.c.l.b16 %v740
      %v758 = vunpack.c.h.b16 %v740
      %v759 = vunpack.c.l.b16 %v741
      %v760 = vunpack.c.h.b16 %v741
      %v761 = vunpack.c.l.b16 %v742
      %v762 = vunpack.c.h.b16 %v742
      %v763 = vunpack.c.l.b16 %v743
      %v764 = vunpack.c.h.b16 %v743
      %v765 = vunpack.c.l.b16 %v744
      %v766 = vunpack.c.h.b16 %v744
      %v767 = vunpack.c.l.b16 %v745
      %v768 = vunpack.c.h.b16 %v745
      %v769 = vunpack.c.l.b16 %v746
      %v770 = vunpack.c.h.b16 %v746
      %v771 = vpack.c.b16 %v755, %v755
      %v772 = vpack.c.b16 %v756, %v756
      %v773 = vpack.c.b16 %v757, %v757
      %v774 = vpack.c.b16 %v758, %v758
      %v775 = vpack.c.b16 %v759, %v759
      %v776 = vpack.c.b16 %v760, %v760
      %v777 = vpack.c.b16 %v761, %v761
      %v778 = vpack.c.b16 %v762, %v762
      %v779 = vpack.c.b16 %v763, %v763
      %v780 = vpack.c.b16 %v764, %v764
      %v781 = vpack.c.b16 %v765, %v765
      %v782 = vpack.c.b16 %v766, %v766
      %v783 = vpack.c.b16 %v767, %v767
      %v784 = vpack.c.b16 %v768, %v768
      %v785 = vpack.c.b16 %v769, %v769
      %v786 = vpack.c.b16 %v770, %v770
      %803 = vst [vmem:[#allocation11] sm:$0xf] %v771
      %804 = vst [vmem:[#allocation11 + $0x4] sm:$0xf] %v772
      %805 = vst [vmem:[#allocation11 + $0x8] sm:$0xf] %v773
      %806 = vst [vmem:[#allocation11 + $0xc] sm:$0xf] %v774
      %807 = vst [vmem:[#allocation11 + $0x10] sm:$0xf] %v775
      %808 = vst [vmem:[#allocation11 + $0x14] sm:$0xf] %v776
      %809 = vst [vmem:[#allocation11 + $0x18] sm:$0xf] %v777
      %810 = vst [vmem:[#allocation11 + $0x1c] sm:$0xf] %v778
      %811 = vst [vmem:[#allocation11 + $0x20] sm:$0xf] %v779
      %812 = vst [vmem:[#allocation11 + $0x24] sm:$0xf] %v780
      %813 = vst [vmem:[#allocation11 + $0x28] sm:$0xf] %v781
      %814 = vst [vmem:[#allocation11 + $0x2c] sm:$0xf] %v782
      %815 = vst [vmem:[#allocation11 + $0x30] sm:$0xf] %v783
      %816 = vst [vmem:[#allocation11 + $0x34] sm:$0xf] %v784
      %817 = vst [vmem:[#allocation11 + $0x38] sm:$0xf] %v785
      %818 = vst [vmem:[#allocation11 + $0x3c] sm:$0xf] %v786
    $region45: #{tpu_custom_call.1} parent=1 // pred_fallthru
      _
    // Predicated region
    $region46: #{tpu_custom_call.1} parent=1 // pred_check
      _
    $region47: #{tpu_custom_call.1} parent=1 // pred_check_branch
      %820 = sbr.rel (0) target = $region49
    $region48: #{tpu_custom_call.1} parent=1 // pred_region
      %s822 = ssub.s32 1024, 1024
      %823 = vsyncadd [#allocation5], %s822
      %s824 = sshll.u32 [#allocation11], 4
      %s825 = int_to_ptr.vmem [resolvable:$true] %s824
      %830 = dma.vmem_to_hbm [thread:$0]  %s825, 1024, %s5, [#allocation5], 64, 64, 4
    $region49: #{tpu_custom_call.1} parent=1 // pred_fallthru
      _
    // Predicated region
    $region50: #{tpu_custom_call.1} parent=1 // pred_check
      _
    $region51: #{tpu_custom_call.1} parent=1 // pred_check_branch
      %832 = sbr.rel (0) target = $region53
    $region52: #{tpu_custom_call.1} parent=1 // pred_region
      %833 = dma.done [#allocation5], 1024
    $region53: #{tpu_custom_call.1} parent=1 // pred_fallthru
      _
    %834 = vsyncpa [#allocation4], 1
    %835 = vsyncpa [#allocation7], 1
    %836 = vsyncpa [#allocation10], 1
    %837 = vsyncpa [#allocation5], 1

</llo_original>
